<compile_context>
chip_gen: v7x
topology: tpu7x:2x2x1
jax: 0.10.0
libtpu: 0.0.40
codegen_flags: <defaults>
</compile_context>

<pallas_src>
import functools

import jax
import jax.numpy as jnp
from jax.experimental import pallas as pl
from jax.experimental.pallas import tpu as pltpu


def _pick_tile(n, candidates):
    for c in candidates:
        if n % c == 0:
            return c
    return n  # full-extent fallback


def _make_convnmf_kernel(loss_type, n_lags, k_pad, tile_f, t_tile, sub, with_pred):
    f_groups = tile_f // sub

    def kernel(w_ref, hwin_ref, data_ref, *rest):
        if with_pred:
            pred_ref, loss_ref, hmat_ref = rest
        else:
            loss_ref, hmat_ref = rest

        i = pl.program_id(1)  # feature-tile index (inner, "arbitrary")

        @pl.when(i == 0)
        def _init():
            # Assemble the unrolled-conv matrix for this T-tile once (amortised
            # over all feature tiles):  hmat[l*Kp + k, t] = Hrev[k, t0 + t + L-1-l].
            for l in range(n_lags):
                s = n_lags - 1 - l
                hmat_ref[l * k_pad:(l + 1) * k_pad, :] = hwin_ref[0, :, s:s + t_tile]
            loss_ref[...] = jnp.zeros_like(loss_ref)

        # Hot path: single MXU matmul, f32 accumulation.
        pred = jnp.dot(w_ref[...], hmat_ref[...],
                       preferred_element_type=jnp.float32)
        if with_pred:
            pred_ref[...] = pred.astype(pred_ref.dtype)

        d = data_ref[...].astype(jnp.float32)
        if loss_type == "quadratic":
            r = pred - d
            e = r * r
        else:  # poisson
            e = pred - jnp.log(pred) * d

        # Sublane-grouped (VPU-only) partial reduction into the per-T-tile vector
        # accumulator; the cross-lane reduce + /denominator happen in the wrapper.
        part = e.reshape(f_groups, sub, t_tile).sum(axis=0)   # (sub, t_tile)
        loss_ref[...] += part[None]

    return kernel


def convnmf_forward(W, H, data, loss="quadratic", *,
                    compute_dtype=jnp.bfloat16, pred_dtype=None,
                    tile_f=None, t_tile=None, with_pred=True):
    """Matches ConvNMF: returns (prediction, loss) or just loss if with_pred=False."""
    if loss not in ("quadratic", "poisson"):
        raise ValueError("loss must be 'quadratic' or 'poisson'")
    n_features, n_components, n_lags = W.shape
    n_timebins = data.shape[1]
    assert H.shape == (n_components, n_timebins + n_lags - 1)

    compute_dtype = jnp.dtype(compute_dtype)
    pred_dtype = compute_dtype if pred_dtype is None else jnp.dtype(pred_dtype)

    # ---- tile selection: lane-dense tiles that divide exactly (no masking needed).
    # TODO(synk): F/T not divisible by the preferred tiles fall back to full-extent
    # blocks; padding + in-kernel masking of ragged edges is not implemented.
    if tile_f is None:
        tile_f = _pick_tile(n_features, (512, 256, 128, 64, 32, 16, 8))
    if t_tile is None:
        t_tile = _pick_tile(n_timebins, (2048, 1024, 512, 256, 128))
    assert n_features % tile_f == 0 and (tile_f % 8 == 0 or tile_f == n_features)
    assert n_timebins % t_tile == 0 and (t_tile % 128 == 0 or t_tile == n_timebins)
    n_f_tiles = n_features // tile_f
    n_t_tiles = n_timebins // t_tile

    itemsize = compute_dtype.itemsize
    sub_pack = 16 if itemsize == 2 else 8          # sublane packing of stream dtype
    k_pad = ((n_components + sub_pack - 1) // sub_pack) * sub_pack
    kl = n_lags * k_pad
    sub = 8 if tile_f % 8 == 0 else tile_f         # loss accumulator sublane extent

    # ---- cheap JAX glue (1x copies only; no L-times-expanded Hmat in HBM) ----
    Hrev = H[:, ::-1]                                              # (K, T+L-1)
    win = t_tile + n_lags - 1
    win_pad = ((win + 127) // 128) * 128
    need = (n_t_tiles - 1) * t_tile + win_pad
    Hrev_p = jnp.pad(Hrev.astype(compute_dtype),
                     ((0, k_pad - n_components),
                      (0, need - (n_timebins + n_lags - 1))))
    starts = jnp.arange(n_t_tiles) * t_tile
    Hwin = jax.vmap(
        lambda s: jax.lax.dynamic_slice_in_dim(Hrev_p, s, win_pad, axis=1))(starts)
    # Hwin: (n_t_tiles, k_pad, win_pad) -- per-T-tile window of time-reversed H.

    Wp = jnp.pad(W, ((0, 0), (0, k_pad - n_components), (0, 0)))   # zero k-rows
    Wflat = jnp.transpose(Wp, (0, 2, 1)).reshape(n_features, kl).astype(compute_dtype)
    data_c = data.astype(compute_dtype)

    kernel = _make_convnmf_kernel(loss, n_lags, k_pad, tile_f, t_tile, sub, with_pred)

    out_shape = []
    out_specs = []
    if with_pred:
        out_shape.append(jax.ShapeDtypeStruct((n_features, n_timebins), pred_dtype))
        out_specs.append(pl.BlockSpec((tile_f, t_tile), lambda j, i: (i, j)))
    out_shape.append(jax.ShapeDtypeStruct((n_t_tiles, sub, t_tile), jnp.float32))
    out_specs.append(pl.BlockSpec((1, sub, t_tile), lambda j, i: (j, 0, 0)))

    # VMEM budget (double-buffered inputs/outputs + scratch), with headroom,
    # clamped to the v7x 64 MiB physical budget.
    vmem_bytes = (2 * tile_f * kl * itemsize
                  + 2 * k_pad * win_pad * itemsize
                  + 2 * tile_f * t_tile * itemsize
                  + 2 * sub * t_tile * 4
                  + kl * t_tile * itemsize)
    if with_pred:
        vmem_bytes += 2 * tile_f * t_tile * pred_dtype.itemsize
    vmem_limit = int(min(64 << 20, max(32 << 20, 1.4 * vmem_bytes + (2 << 20))))

    outs = pl.pallas_call(
        kernel,
        out_shape=tuple(out_shape),
        grid_spec=pltpu.PrefetchScalarGridSpec(
            num_scalar_prefetch=0,
            grid=(n_t_tiles, n_f_tiles),           # T outer ("parallel"), F inner
            in_specs=[
                pl.BlockSpec((tile_f, kl), lambda j, i: (i, 0)),            # Wflat
                pl.BlockSpec((1, k_pad, win_pad), lambda j, i: (j, 0, 0)),  # Hwin
                pl.BlockSpec((tile_f, t_tile), lambda j, i: (i, j)),        # data
            ],
            out_specs=tuple(out_specs),
            scratch_shapes=[pltpu.VMEM((kl, t_tile), compute_dtype)],       # Hmat
        ),
        compiler_params=pltpu.CompilerParams(
            dimension_semantics=("parallel", "arbitrary"),
            vmem_limit_bytes=vmem_limit),
    )(Wflat, Hwin, data_c)

    if with_pred:
        pred, loss_parts = outs
    else:
        (loss_parts,) = outs
        pred = None

    loss_val = jnp.sum(loss_parts) / (n_features * n_timebins)
    if with_pred:
        return pred, loss_val
    return loss_val


def _reference_forward(W, H, data, loss="quadratic", compute_dtype=jnp.float32):
    """Pure-JAX reference mirroring the PyTorch semantics (and the kernel's casts)."""
    n_features, n_components, n_lags = W.shape
    n_timebins = data.shape[1]
    cd = jnp.dtype(compute_dtype)
    Wc = W.astype(cd).astype(jnp.float32)
    Hc = H.astype(cd).astype(jnp.float32)
    dc = data.astype(cd).astype(jnp.float32)
    t_idx = jnp.arange(n_timebins)
    l_idx = jnp.arange(n_lags)
    gather_idx = (n_timebins - 1) - t_idx[None, :] + l_idx[:, None]   # (L, T)
    Hmat3 = Hc[:, gather_idx]                                         # (K, L, T)
    pred = jnp.einsum("fkl,klt->ft", Wc, Hmat3)                       # (F, T)
    if loss == "quadratic":
        r = pred - dc
        val = jnp.sum(r * r) / (n_features * n_timebins)
    else:
        val = jnp.mean(pred - jnp.log(pred) * dc)
    return pred, val


if __name__ == "__main__":
    # Small shapes consistent with the module.
    n_features, n_components, n_lags, n_timebins = 32, 4, 8, 256

    key = jax.random.PRNGKey(0)
    kd, kw, kh = jax.random.split(key, 3)
    data = jax.random.uniform(kd, (n_features, n_timebins), jnp.float32)

    # Parameter init exactly as ConvNMF.__init__.
    W_pre = jax.random.uniform(kw, (n_features, n_components, n_lags), jnp.float32)
    H_pre = jax.random.uniform(kh, (n_components, n_timebins + n_lags - 1), jnp.float32)
    data_norm = jnp.linalg.norm(data)
    W = W_pre * jnp.sqrt(data_norm) / jnp.linalg.norm(jax.nn.softplus(W_pre))
    H = H_pre * jnp.sqrt(data_norm) / jnp.linalg.norm(jax.nn.softplus(H_pre))

    # 1) f32 streams, default (single-block) tiles -- tight check vs the reference.
    fwd32 = jax.jit(functools.partial(convnmf_forward, loss="quadratic",
                                      compute_dtype=jnp.float32))
    pred32, loss32 = fwd32(W, H, data)
    jax.block_until_ready((pred32, loss32))
    pred_r, loss_r = _reference_forward(W, H, data, "quadratic", jnp.float32)
    assert jnp.allclose(pred32, pred_r, rtol=1e-4, atol=1e-4)
    assert jnp.allclose(loss32, loss_r, rtol=1e-4, atol=1e-4)

    # 2) f32 poisson with explicit small tiles to exercise the 2x2 grid,
    #    per-T-tile Hmat assembly and loss accumulation across feature tiles.
    fwdp = jax.jit(functools.partial(convnmf_forward, loss="poisson",
                                     compute_dtype=jnp.float32,
                                     tile_f=16, t_tile=128))
    predp, lossp = fwdp(W, H, data)
    jax.block_until_ready((predp, lossp))
    predp_r, lossp_r = _reference_forward(W, H, data, "poisson", jnp.float32)
    assert jnp.allclose(predp, predp_r, rtol=1e-4, atol=1e-4)
    assert jnp.allclose(lossp, lossp_r, rtol=1e-4, atol=1e-4)

    # 3) bf16 streams (default), loss-only mode (no pred writeback).
    fwd_bf = jax.jit(functools.partial(convnmf_forward, loss="quadratic",
                                       compute_dtype=jnp.bfloat16,
                                       with_pred=False))
    loss_bf = fwd_bf(W, H, data)
    jax.block_until_ready(loss_bf)
    _, loss_bf_r = _reference_forward(W, H, data, "quadratic", jnp.bfloat16)
    assert jnp.allclose(loss_bf, loss_bf_r, rtol=1e-2, atol=1e-2)

    print("KERNEL_OK")
</pallas_src>

<mosaic_0001>
module attributes {stable_mosaic.version = 11 : i64} {
  func.func @kernel(%arg0: i32, %arg1: i32, %arg2: memref<32x64xf32, #tpu.memory_space<vmem>>, %arg3: memref<1x8x384xf32, #tpu.memory_space<vmem>>, %arg4: memref<32x256xf32, #tpu.memory_space<vmem>>, %arg5: memref<32x256xf32, #tpu.memory_space<vmem>>, %arg6: memref<1x8x256xf32, #tpu.memory_space<vmem>>, %arg7: memref<64x256xf32, #tpu.memory_space<vmem>>) attributes {dimension_semantics = [#tpu.dimension_semantics<parallel>, #tpu.dimension_semantics<arbitrary>], iteration_bounds = array<i64: 1, 1>, scalar_prefetch = 0 : i64, scratch_operands = 1 : i64, tpu.core_type = #tpu.core_type<tc>, window_params = [{transform_indices = @transform_0, window_bounds = array<i64: 32, 64>}, {transform_indices = @transform_1, window_bounds = array<i64: 1, 8, 384>}, {transform_indices = @transform_2, window_bounds = array<i64: 32, 256>}, {transform_indices = @transform_3, window_bounds = array<i64: 32, 256>}, {transform_indices = @transform_4, window_bounds = array<i64: 1, 8, 256>}]} {
    %c0_i32 = arith.constant 0 : i32
    %0 = arith.cmpi eq, %arg1, %c0_i32 : i32
    %1 = arith.extui %0 : i1 to i32
    %c0_i32_0 = arith.constant 0 : i32
    %2 = arith.cmpi ne, %1, %c0_i32_0 : i32
    scf.if %2 {
      %c0_15 = arith.constant 0 : index
      %c0_16 = arith.constant 0 : index
      %c7 = arith.constant 7 : index
      %16 = vector.load %arg3[%c0_15, %c0_16, %c7] : memref<1x8x384xf32, #tpu.memory_space<vmem>>, vector<1x8x256xf32>
      %17 = vector.shape_cast %16 : vector<1x8x256xf32> to vector<8x256xf32>
      %c0_17 = arith.constant 0 : index
      %c0_18 = arith.constant 0 : index
      %18 = vector.load %arg7[%c0_17, %c0_18] : memref<64x256xf32, #tpu.memory_space<vmem>>, vector<8x256xf32>
      tpu.vector_store %arg7[%c0_17, %c0_18], %17 {strides = array<i32>} : memref<64x256xf32, #tpu.memory_space<vmem>>, vector<8x256xf32>,
      %c0_19 = arith.constant 0 : index
      %c0_20 = arith.constant 0 : index
      %c6 = arith.constant 6 : index
      %19 = vector.load %arg3[%c0_19, %c0_20, %c6] : memref<1x8x384xf32, #tpu.memory_space<vmem>>, vector<1x8x256xf32>
      %20 = vector.shape_cast %19 : vector<1x8x256xf32> to vector<8x256xf32>
      %c8 = arith.constant 8 : index
      %c0_21 = arith.constant 0 : index
      %21 = vector.load %arg7[%c8, %c0_21] : memref<64x256xf32, #tpu.memory_space<vmem>>, vector<8x256xf32>
      tpu.vector_store %arg7[%c8, %c0_21], %20 {strides = array<i32>} : memref<64x256xf32, #tpu.memory_space<vmem>>, vector<8x256xf32>,
      %c0_22 = arith.constant 0 : index
      %c0_23 = arith.constant 0 : index
      %c5 = arith.constant 5 : index
      %22 = vector.load %arg3[%c0_22, %c0_23, %c5] : memref<1x8x384xf32, #tpu.memory_space<vmem>>, vector<1x8x256xf32>
      %23 = vector.shape_cast %22 : vector<1x8x256xf32> to vector<8x256xf32>
      %c16 = arith.constant 16 : index
      %c0_24 = arith.constant 0 : index
      %24 = vector.load %arg7[%c16, %c0_24] : memref<64x256xf32, #tpu.memory_space<vmem>>, vector<8x256xf32>
      tpu.vector_store %arg7[%c16, %c0_24], %23 {strides = array<i32>} : memref<64x256xf32, #tpu.memory_space<vmem>>, vector<8x256xf32>,
      %c0_25 = arith.constant 0 : index
      %c0_26 = arith.constant 0 : index
      %c4 = arith.constant 4 : index
      %25 = vector.load %arg3[%c0_25, %c0_26, %c4] : memref<1x8x384xf32, #tpu.memory_space<vmem>>, vector<1x8x256xf32>
      %26 = vector.shape_cast %25 : vector<1x8x256xf32> to vector<8x256xf32>
      %c24 = arith.constant 24 : index
      %c0_27 = arith.constant 0 : index
      %27 = vector.load %arg7[%c24, %c0_27] : memref<64x256xf32, #tpu.memory_space<vmem>>, vector<8x256xf32>
      tpu.vector_store %arg7[%c24, %c0_27], %26 {strides = array<i32>} : memref<64x256xf32, #tpu.memory_space<vmem>>, vector<8x256xf32>,
      %c0_28 = arith.constant 0 : index
      %c0_29 = arith.constant 0 : index
      %c3 = arith.constant 3 : index
      %28 = vector.load %arg3[%c0_28, %c0_29, %c3] : memref<1x8x384xf32, #tpu.memory_space<vmem>>, vector<1x8x256xf32>
      %29 = vector.shape_cast %28 : vector<1x8x256xf32> to vector<8x256xf32>
      %c32 = arith.constant 32 : index
      %c0_30 = arith.constant 0 : index
      %30 = vector.load %arg7[%c32, %c0_30] : memref<64x256xf32, #tpu.memory_space<vmem>>, vector<8x256xf32>
      tpu.vector_store %arg7[%c32, %c0_30], %29 {strides = array<i32>} : memref<64x256xf32, #tpu.memory_space<vmem>>, vector<8x256xf32>,
      %c0_31 = arith.constant 0 : index
      %c0_32 = arith.constant 0 : index
      %c2 = arith.constant 2 : index
      %31 = vector.load %arg3[%c0_31, %c0_32, %c2] : memref<1x8x384xf32, #tpu.memory_space<vmem>>, vector<1x8x256xf32>
      %32 = vector.shape_cast %31 : vector<1x8x256xf32> to vector<8x256xf32>
      %c40 = arith.constant 40 : index
      %c0_33 = arith.constant 0 : index
      %33 = vector.load %arg7[%c40, %c0_33] : memref<64x256xf32, #tpu.memory_space<vmem>>, vector<8x256xf32>
      tpu.vector_store %arg7[%c40, %c0_33], %32 {strides = array<i32>} : memref<64x256xf32, #tpu.memory_space<vmem>>, vector<8x256xf32>,
      %c0_34 = arith.constant 0 : index
      %c0_35 = arith.constant 0 : index
      %c1 = arith.constant 1 : index
      %34 = vector.load %arg3[%c0_34, %c0_35, %c1] : memref<1x8x384xf32, #tpu.memory_space<vmem>>, vector<1x8x256xf32>
      %35 = vector.shape_cast %34 : vector<1x8x256xf32> to vector<8x256xf32>
      %c48 = arith.constant 48 : index
      %c0_36 = arith.constant 0 : index
      %36 = vector.load %arg7[%c48, %c0_36] : memref<64x256xf32, #tpu.memory_space<vmem>>, vector<8x256xf32>
      tpu.vector_store %arg7[%c48, %c0_36], %35 {strides = array<i32>} : memref<64x256xf32, #tpu.memory_space<vmem>>, vector<8x256xf32>,
      %c0_37 = arith.constant 0 : index
      %c0_38 = arith.constant 0 : index
      %c0_39 = arith.constant 0 : index
      %37 = vector.load %arg3[%c0_37, %c0_38, %c0_39] : memref<1x8x384xf32, #tpu.memory_space<vmem>>, vector<1x8x256xf32>
      %38 = vector.shape_cast %37 : vector<1x8x256xf32> to vector<8x256xf32>
      %c56 = arith.constant 56 : index
      %c0_40 = arith.constant 0 : index
      %39 = vector.load %arg7[%c56, %c0_40] : memref<64x256xf32, #tpu.memory_space<vmem>>, vector<8x256xf32>
      tpu.vector_store %arg7[%c56, %c0_40], %38 {strides = array<i32>} : memref<64x256xf32, #tpu.memory_space<vmem>>, vector<8x256xf32>,
      %cst_41 = arith.constant 0.000000e+00 : f32
      %40 = vector.broadcast %cst_41 : f32 to vector<1x8x256xf32>
      %c0_42 = arith.constant 0 : index
      %c0_43 = arith.constant 0 : index
      %c0_44 = arith.constant 0 : index
      %41 = vector.load %arg6[%c0_42, %c0_43, %c0_44] : memref<1x8x256xf32, #tpu.memory_space<vmem>>, vector<1x8x256xf32>
      tpu.vector_store %arg6[%c0_42, %c0_43, %c0_44], %40 {strides = array<i32>} : memref<1x8x256xf32, #tpu.memory_space<vmem>>, vector<1x8x256xf32>,
    } else {
    }
    %c0 = arith.constant 0 : index
    %c0_1 = arith.constant 0 : index
    %3 = vector.load %arg2[%c0, %c0_1] : memref<32x64xf32, #tpu.memory_space<vmem>>, vector<32x64xf32>
    %c0_2 = arith.constant 0 : index
    %c0_3 = arith.constant 0 : index
    %4 = vector.load %arg7[%c0_2, %c0_3] : memref<64x256xf32, #tpu.memory_space<vmem>>, vector<64x256xf32>
    %cst = arith.constant dense<0.000000e+00> : vector<32x256xf32>
    %5 = tpu.matmul %3, %4, %cst {dimension_numbers = #tpu.dot_dimension_numbers<[1], [0], [0], [1], [0, 0, 1, 1], [], []>} : vector<32x64xf32>, vector<64x256xf32>, vector<32x256xf32> -> vector<32x256xf32>
    %c0_4 = arith.constant 0 : index
    %c0_5 = arith.constant 0 : index
    %6 = vector.load %arg5[%c0_4, %c0_5] : memref<32x256xf32, #tpu.memory_space<vmem>>, vector<32x256xf32>
    tpu.vector_store %arg5[%c0_4, %c0_5], %5 {strides = array<i32>} : memref<32x256xf32, #tpu.memory_space<vmem>>, vector<32x256xf32>,
    %c0_6 = arith.constant 0 : index
    %c0_7 = arith.constant 0 : index
    %7 = vector.load %arg4[%c0_6, %c0_7] : memref<32x256xf32, #tpu.memory_space<vmem>>, vector<32x256xf32>
    %8 = arith.subf %5, %7 : vector<32x256xf32>
    %9 = arith.mulf %8, %8 : vector<32x256xf32>
    %10 = vector.shape_cast %9 : vector<32x256xf32> to vector<4x8x256xf32>
    %cst_8 = arith.constant dense<0.000000e+00> : vector<8x256xf32>
    %11 = vector.multi_reduction <add>, %10, %cst_8 [0] : vector<4x8x256xf32> to vector<8x256xf32>
    %c0_9 = arith.constant 0 : index
    %c0_10 = arith.constant 0 : index
    %c0_11 = arith.constant 0 : index
    %12 = vector.load %arg6[%c0_9, %c0_10, %c0_11] : memref<1x8x256xf32, #tpu.memory_space<vmem>>, vector<1x8x256xf32>
    %13 = vector.shape_cast %11 : vector<8x256xf32> to vector<1x8x256xf32>
    %14 = arith.addf %12, %13 : vector<1x8x256xf32>
    %c0_12 = arith.constant 0 : index
    %c0_13 = arith.constant 0 : index
    %c0_14 = arith.constant 0 : index
    %15 = vector.load %arg6[%c0_12, %c0_13, %c0_14] : memref<1x8x256xf32, #tpu.memory_space<vmem>>, vector<1x8x256xf32>
    tpu.vector_store %arg6[%c0_12, %c0_13, %c0_14], %14 {strides = array<i32>} : memref<1x8x256xf32, #tpu.memory_space<vmem>>, vector<1x8x256xf32>,
    return
  }
  func.func @transform_0(%arg0: i32, %arg1: i32) -> (i32, i32) {
    %c0_i32 = arith.constant 0 : i32
    %c0_i32_0 = arith.constant 0 : i32
    return %arg1, %c0_i32 : i32, i32
  }
  func.func @transform_1(%arg0: i32, %arg1: i32) -> (i32, i32, i32) {
    %c0_i32 = arith.constant 0 : i32
    %c0_i32_0 = arith.constant 0 : i32
    %c0_i32_1 = arith.constant 0 : i32
    return %arg0, %c0_i32, %c0_i32_0 : i32, i32, i32
  }
  func.func @transform_2(%arg0: i32, %arg1: i32) -> (i32, i32) {
    %c0_i32 = arith.constant 0 : i32
    return %arg1, %arg0 : i32, i32
  }
  func.func @transform_3(%arg0: i32, %arg1: i32) -> (i32, i32) {
    %c0_i32 = arith.constant 0 : i32
    return %arg1, %arg0 : i32, i32
  }
  func.func @transform_4(%arg0: i32, %arg1: i32) -> (i32, i32, i32) {
    %c0_i32 = arith.constant 0 : i32
    %c0_i32_0 = arith.constant 0 : i32
    %c0_i32_1 = arith.constant 0 : i32
    return %arg0, %c0_i32, %c0_i32_0 : i32, i32, i32
  }
}

</mosaic_0001>

<llo_original>
// kernel: reverse
$region0: #{reverse}
  %s0 = inlined_call_operand.vmem [shape: f32[4,384], index: 0, kind: input, shape index: {}]
  %s1 = inlined_call_operand.vmem [shape: f32[4,384], index: 1, kind: output, shape index: {}]
  %v2 = vlaneseq
  %v3 = vsub.s32 127, %v2
  %4 = vset.pattern.permute.xlu0 %v3
  $region1: #{reverse} parent=0
    #allocation0 [shape = 'u8[4096]{0}', space=vmem, size = 0x1000, scoped, tag = 'operand span for operand 0']
    #allocation1 [shape = 'u8[4096]{0}', space=vmem, size = 0x1000, scoped, tag = 'packed  for operand 0']
    #allocation2 [shape = 'u8[4096]{0}', space=vmem, size = 0x1000, scoped, tag = 'operand span for operand 1']
    #allocation3 [shape = 'u8[4096]{0}', space=vmem, size = 0x1000, scoped, tag = 'packed  for operand 1']
    loop: start=0, step=1, limit=5
    $region2: #{reverse} parent=1 // loop_pre_header
      _
    $region3: #{reverse} parent=1 // loop_header
      %s6 = sphi 0, %s10
      %p7 = scmp.ge.s32.totalorder %s6, 5
      %s13 = sphi 0, %s25
      %s14 = sphi 0, %s21
      %s15 = sphi 0, %s13
      %s16 = sphi 0, %s14
      %s17 = sphi 0, %s15
      %s18 = sphi 0, %s16
    $region4: #{reverse} parent=1 // loop_header_branch
      %9 = sbr.rel (%p7) target = $region8
    $region5: #{reverse} parent=1 // loop_body
      %s11 = ssub.s32 %s6, 1
      %s12 = ssub.s32 %s6, 2
      %s19 = sadd.s32 1, %s14
      %p20 = scmp.ge.s32.totalorder %s19, 3
      %s21 = scalar_select %p20, 0, %s19
      %s22 = sadd.s32 1, %s13
      %s23 = scalar_select %p20, %s22, %s13
      %p24 = scmp.ge.s32.totalorder %s23, 1
      %s25 = scalar_select %p24, 0, %s23
      %p26 = scmp.le.s32.totalorder 1, %s6
      %p27 = scmp.lt.s32.totalorder %s6, 4
      %p28 = pnand %p26, %p27
      %p29 = pneg %p28
      // Predicated region
      $region9: #{reverse} parent=5 // pred_check
        _
      $region10: #{reverse} parent=5 // pred_check_branch
        %31 = sbr.rel (%p28) target = $region12
      $region11: #{reverse} parent=5 // pred_region
        %s32 = ssub.s32 %s6, 1
      $region12: #{reverse} parent=5 // pred_fallthru
        _
      %p33 = scmp.lt.s32.totalorder %s6, 3
      // Predicated region
      $region13: #{reverse} parent=5 // pred_check
        %p34 = pneg %p33
      $region14: #{reverse} parent=5 // pred_check_branch
        %36 = sbr.rel (%p34) target = $region16
      $region15: #{reverse} parent=5 // pred_region
        %s37 = sand.u32 %s6, 1
        %s38 = sand.u32 %s6, 1
        %s39 = smul.addr %s38, 4
        %s40 = scalar_lea.vmem [#allocation1], %s39
        %s41 = ssub.s32 2, %s14
        %s42 = smul.addr %s13, 3
        %s43 = sadd.s32 %s41, %s42
        %s44 = smul.addr %s43, 4
        %s45 = scalar_lea.vmem %s0, %s44
        // Predicated region
        $region17: #{reverse} parent=15 // pred_check
          _
        $region18: #{reverse} parent=15 // pred_check_branch
          %47 = sbr.rel (0) target = $region20
        $region19: #{reverse} parent=15 // pred_region
          // Predicated region
          $region21: #{reverse} parent=19 // pred_check
            _
          $region22: #{reverse} parent=19 // pred_check_branch
            %49 = sbr.rel target = $region24
          $region23: #{reverse} parent=19 // pred_region
            // Predicated region
            $region36: #{reverse} parent=23 // pred_check
              _
            $region37: #{reverse} parent=23 // pred_check_branch
              %64 = sbr.rel (0) target = $region39
            $region38: #{reverse} parent=23 // pred_region
              loop: start=0, step=1, limit=1
              $region40: #{reverse} parent=38 // loop_pre_header
                _
              $region41: #{reverse} parent=38 // loop_header
                %s67 = sphi 0, %s71
                %p68 = scmp.ge.s32.totalorder %s67, 1
                %s72 = sphi %s45, %s45
                %s73 = sphi %s40, %s40
              $region42: #{reverse} parent=38 // loop_header_branch
                %70 = sbr.rel (%p68) target = $region46
              $region43: #{reverse} parent=38 // loop_body
                %v74 = vld [vmem:[%s72] sm:$0xf]
                %75 = vst [vmem:[%s73] sm:$0xf] %v74
              $region44: #{reverse} parent=38 // loop_footer
                %s71 = sadd.s32 1, %s67
              $region45: #{reverse} parent=38 // loop_footer_branch
                %66 = sbr.rel target = $region41
              $region46: #{reverse} parent=38 // loop_exit
                _
            $region39: #{reverse} parent=23 // pred_fallthru
              _
          $region24: #{reverse} parent=19 // pred_fallthru
            _
          // Predicated region
          $region25: #{reverse} parent=19 // pred_check
            _
          $region26: #{reverse} parent=19 // pred_check_branch
            %51 = sbr.rel (0) target = $region28
          $region27: #{reverse} parent=19 // pred_region
            loop: start=0, step=1, limit=1
            $region29: #{reverse} parent=27 // loop_pre_header
              _
            $region30: #{reverse} parent=27 // loop_header
              %s54 = sphi 0, %s58
              %p55 = scmp.ge.s32.totalorder %s54, 1
              %s59 = sphi %s45, %s45
              %s60 = sphi %s40, %s40
            $region31: #{reverse} parent=27 // loop_header_branch
              %57 = sbr.rel (%p55) target = $region35
            $region32: #{reverse} parent=27 // loop_body
              %v61 = vld [vmem:[%s59] sm:$0xf]
              %62 = vst [vmem:[%s60] sm:$0xf] %v61
            $region33: #{reverse} parent=27 // loop_footer
              %s58 = sadd.s32 1, %s54
            $region34: #{reverse} parent=27 // loop_footer_branch
              %53 = sbr.rel target = $region30
            $region35: #{reverse} parent=27 // loop_exit
              _
          $region28: #{reverse} parent=19 // pred_fallthru
            _
        $region20: #{reverse} parent=15 // pred_fallthru
          _
        %76 = vnop
      $region16: #{reverse} parent=5 // pred_fallthru
        _
      %p77 = scmp.le.s32.totalorder 1, %s6
      %p78 = scmp.lt.s32.totalorder %s6, 4
      %p79 = pnand %p77, %p78
      %p80 = pneg %p79
      // Predicated region
      $region47: #{reverse} parent=5 // pred_check
        _
      $region48: #{reverse} parent=5 // pred_check_branch
        %82 = sbr.rel (%p79) target = $region50
      $region49: #{reverse} parent=5 // pred_region
        %s83 = ssub.s32 %s6, 1
        %s84 = sand.u32 %s11, 1
        %s85 = sand.u32 %s11, 1
        %s86 = smul.addr %s85, 4
        %s87 = scalar_lea.vmem [#allocation1], %s86
        %s88 = sand.u32 %s11, 1
        %s89 = sand.u32 %s11, 1
        %s90 = smul.addr %s89, 4
        %s91 = scalar_lea.vmem [#allocation1], %s90
        %s92 = sand.u32 %s11, 1
        %s93 = sand.u32 %s11, 1
        %s94 = smul.addr %s93, 4
        %s95 = scalar_lea.vmem [#allocation3], %s94
        %s97 = sshllo.u32 0, 4
        %v98 = vld [vmem:[%s91] sm:%s97]
        %99 = vst [vmem:[#allocation0] sm:%s97] %v98
        %s100 = ssub.s32 2, %s16
        %v101 = vld [vmem:[#allocation0] sm:$0xff]
        %102 = vperm.xlu0 %4, %v101
        %v103 = vpop.permute.xlu0 %102
        %104 = vst [vmem:[#allocation2] sm:$0xff] %v103
        %s106 = sshllo.u32 0, 4
        %v108 = vld [vmem:[#allocation2] sm:%s106]
        %s109 = sshllo.u32 0, 4
        %110 = vst [vmem:[%s95] sm:%s109] %v108
        %s111 = sand.u32 %s11, 1
        %s112 = sand.u32 %s11, 1
        %s113 = smul.addr %s112, 4
        %s114 = scalar_lea.vmem [#allocation3], %s113
        %s115 = smul.addr %s15, 3
        %s116 = sadd.s32 %s16, %s115
        %s117 = smul.addr %s116, 4
        %s118 = scalar_lea.vmem %s1, %s117
        // Predicated region
        $region51: #{reverse} parent=49 // pred_check
          _
        $region52: #{reverse} parent=49 // pred_check_branch
          %120 = sbr.rel (0) target = $region54
        $region53: #{reverse} parent=49 // pred_region
          // Predicated region
          $region55: #{reverse} parent=53 // pred_check
            _
          $region56: #{reverse} parent=53 // pred_check_branch
            %122 = sbr.rel target = $region58
          $region57: #{reverse} parent=53 // pred_region
            // Predicated region
            $region70: #{reverse} parent=57 // pred_check
              _
            $region71: #{reverse} parent=57 // pred_check_branch
              %137 = sbr.rel (0) target = $region73
            $region72: #{reverse} parent=57 // pred_region
              loop: start=0, step=1, limit=1
              $region74: #{reverse} parent=72 // loop_pre_header
                _
              $region75: #{reverse} parent=72 // loop_header
                %s140 = sphi 0, %s144
                %p141 = scmp.ge.s32.totalorder %s140, 1
                %s145 = sphi %s114, %s114
                %s146 = sphi %s118, %s118
              $region76: #{reverse} parent=72 // loop_header_branch
                %143 = sbr.rel (%p141) target = $region80
              $region77: #{reverse} parent=72 // loop_body
                %v147 = vld [vmem:[%s145] sm:$0xf]
                %148 = vst [vmem:[%s146] sm:$0xf] %v147
              $region78: #{reverse} parent=72 // loop_footer
                %s144 = sadd.s32 1, %s140
              $region79: #{reverse} parent=72 // loop_footer_branch
                %139 = sbr.rel target = $region75
              $region80: #{reverse} parent=72 // loop_exit
                _
            $region73: #{reverse} parent=57 // pred_fallthru
              _
          $region58: #{reverse} parent=53 // pred_fallthru
            _
          // Predicated region
          $region59: #{reverse} parent=53 // pred_check
            _
          $region60: #{reverse} parent=53 // pred_check_branch
            %124 = sbr.rel (0) target = $region62
          $region61: #{reverse} parent=53 // pred_region
            loop: start=0, step=1, limit=1
            $region63: #{reverse} parent=61 // loop_pre_header
              _
            $region64: #{reverse} parent=61 // loop_header
              %s127 = sphi 0, %s131
              %p128 = scmp.ge.s32.totalorder %s127, 1
              %s132 = sphi %s114, %s114
              %s133 = sphi %s118, %s118
            $region65: #{reverse} parent=61 // loop_header_branch
              %130 = sbr.rel (%p128) target = $region69
            $region66: #{reverse} parent=61 // loop_body
              %v134 = vld [vmem:[%s132] sm:$0xf]
              %135 = vst [vmem:[%s133] sm:$0xf] %v134
            $region67: #{reverse} parent=61 // loop_footer
              %s131 = sadd.s32 1, %s127
            $region68: #{reverse} parent=61 // loop_footer_branch
              %126 = sbr.rel target = $region64
            $region69: #{reverse} parent=61 // loop_exit
              _
          $region62: #{reverse} parent=53 // pred_fallthru
            _
        $region54: #{reverse} parent=49 // pred_fallthru
          _
        %149 = vnop
      $region50: #{reverse} parent=5 // pred_fallthru
        _
      %p150 = scmp.le.s32.totalorder 2, %s6
      // Predicated region
      $region81: #{reverse} parent=5 // pred_check
        %p151 = pneg %p150
      $region82: #{reverse} parent=5 // pred_check_branch
        %153 = sbr.rel (%p151) target = $region84
      $region83: #{reverse} parent=5 // pred_region
        %s154 = ssub.s32 %s6, 2
        %s155 = sand.u32 %s12, 1
        %s156 = sand.u32 %s12, 1
        %s157 = smul.addr %s156, 4
        %s158 = scalar_lea.vmem [#allocation3], %s157
      $region84: #{reverse} parent=5 // pred_fallthru
        _
    $region6: #{reverse} parent=1 // loop_footer
      %s10 = sadd.s32 1, %s6
    $region7: #{reverse} parent=1 // loop_footer_branch
      %5 = sbr.rel target = $region3
    $region8: #{reverse} parent=1 // loop_exit
      _

// kernel: convnmf_forward.1
$region0: #{convnmf_forward.1}
  #allocation0 [shape = 'u32[]', space=smem, size = 0x4, offset = 0x4, fixed_abs, tag = 'smem constant byte address 0x4 - core index']
  #allocation1 [shape = 'u32[144,128]{1,0:T(1,128)}', space=vmem, size = 0x12000, scoped, tag = 'internal scratch']
  #allocation2 [shape = 'f32[64,256]{1,0:T(8,128)}', space=vmem, size = 0x10000, scoped, tag = 'scratch operand']
  %s0 = inlined_call_operand.vmem [shape: f32[32,64], index: 0, kind: input, shape index: {}]
  %s1 = inlined_call_operand.vmem [shape: f32[1,8,384], index: 1, kind: input, shape index: {}]
  %s2 = inlined_call_operand.vmem [shape: f32[32,256], index: 2, kind: input, shape index: {}]
  %s3 = inlined_call_operand.hbm [shape: f32[32,256], index: 3, kind: output, shape index: {0}]
  %s4 = inlined_call_operand.vmem [shape: f32[1,8,256], index: 4, kind: output, shape index: {1}]
  %5 = xla_tuple %s3, %s4
  %s6 = sld [smem:[#allocation0]]
  $region34: #{convnmf_forward.1} parent=0
    _
  %s8 = ssub.s32 1, %s6
  %s9 = scalar_select 0, %s8, %s6
  $region1: #{convnmf_forward.1} parent=0
    #allocation3 [shape = 'u8[32768]{0}', space=vmem, size = 0x8000, scoped, tag = 'output window, operand 0, single buffered']
    #allocation4 [shape = 's32[1]{0}', space=sflag, size = 0x4, scoped, tag = 'scoped memory for convnmf_forward.1']
    %10 = vsyncpa [#allocation4], 0
    // Predicated region
    $region2: #{convnmf_forward.1} parent=1 // pred_check
      _
    $region3: #{convnmf_forward.1} parent=1 // pred_check_branch
      %12 = sbr.rel (0) target = $region5
    $region4: #{convnmf_forward.1} parent=1 // pred_region
      _
    $region5: #{convnmf_forward.1} parent=1 // pred_fallthru
      _
    // Predicated region
    $region6: #{convnmf_forward.1} parent=1 // pred_check
      _
    $region7: #{convnmf_forward.1} parent=1 // pred_check_branch
      %14 = sbr.rel (0) target = $region9
    $region8: #{convnmf_forward.1} parent=1 // pred_region
      _
    $region9: #{convnmf_forward.1} parent=1 // pred_fallthru
      _
    // Predicated region
    $region10: #{convnmf_forward.1} parent=1 // pred_check
      _
    $region11: #{convnmf_forward.1} parent=1 // pred_check_branch
      %16 = sbr.rel (0) target = $region13
    $region12: #{convnmf_forward.1} parent=1 // pred_region
      _
    $region13: #{convnmf_forward.1} parent=1 // pred_fallthru
      _
    %p17 = scmp.eq.s32.totalorder 0, 0
    // Predicated region
    $region14: #{convnmf_forward.1} parent=1 // pred_check
      %p18 = pneg %p17
    $region15: #{convnmf_forward.1} parent=1 // pred_check_branch
      %20 = sbr.rel (%p18) target = $region17
    $region16: #{convnmf_forward.1} parent=1 // pred_region
      %v21 = vld [vmem:[%s1] sm:$0xff]
      %v22 = vld [vmem:[%s1 + $0x8] sm:$0xff]
      %v23 = vld [vmem:[%s1 + $0x10] sm:$0xff]
      %27 = vrot.lane.b32.xlu0 %v21, 121
      %v28 = vpop.permute.xlu0 %27
      %29 = vrot.lane.b32.xlu0 %v22, 121
      %v30 = vpop.permute.xlu0 %29
      %31 = vrot.lane.b32.xlu0 %v23, 121
      %v32 = vpop.permute.xlu0 %31
      %vm33 = vcmask 990208
      %v34 = vsel %vm33, %v28, %v30
      %v35 = vsel %vm33, %v30, %v32
      %38 = vst [vmem:[#allocation2] sm:$0xff] %v34
      %39 = vst [vmem:[#allocation2 + $0x8] sm:$0xff] %v35
      %v40 = vld [vmem:[%s1] sm:$0xff]
      %v41 = vld [vmem:[%s1 + $0x8] sm:$0xff]
      %v42 = vld [vmem:[%s1 + $0x10] sm:$0xff]
      %46 = vrot.lane.b32.xlu0 %v40, 122
      %v47 = vpop.permute.xlu0 %46
      %48 = vrot.lane.b32.xlu0 %v41, 122
      %v49 = vpop.permute.xlu0 %48
      %50 = vrot.lane.b32.xlu0 %v42, 122
      %v51 = vpop.permute.xlu0 %50
      %vm52 = vcmask 998400
      %v53 = vsel %vm52, %v47, %v49
      %v54 = vsel %vm52, %v49, %v51
      %57 = vst [vmem:[#allocation2 + $0x10] sm:$0xff] %v53
      %58 = vst [vmem:[#allocation2 + $0x18] sm:$0xff] %v54
      %v59 = vld [vmem:[%s1] sm:$0xff]
      %v60 = vld [vmem:[%s1 + $0x8] sm:$0xff]
      %v61 = vld [vmem:[%s1 + $0x10] sm:$0xff]
      %65 = vrot.lane.b32.xlu0 %v59, 123
      %v66 = vpop.permute.xlu0 %65
      %67 = vrot.lane.b32.xlu0 %v60, 123
      %v68 = vpop.permute.xlu0 %67
      %69 = vrot.lane.b32.xlu0 %v61, 123
      %v70 = vpop.permute.xlu0 %69
      %vm71 = vcmask 1006592
      %v72 = vsel %vm71, %v66, %v68
      %v73 = vsel %vm71, %v68, %v70
      %76 = vst [vmem:[#allocation2 + $0x20] sm:$0xff] %v72
      %77 = vst [vmem:[#allocation2 + $0x28] sm:$0xff] %v73
      %v78 = vld [vmem:[%s1] sm:$0xff]
      %v79 = vld [vmem:[%s1 + $0x8] sm:$0xff]
      %v80 = vld [vmem:[%s1 + $0x10] sm:$0xff]
      %84 = vrot.lane.b32.xlu0 %v78, 124
      %v85 = vpop.permute.xlu0 %84
      %86 = vrot.lane.b32.xlu0 %v79, 124
      %v87 = vpop.permute.xlu0 %86
      %88 = vrot.lane.b32.xlu0 %v80, 124
      %v89 = vpop.permute.xlu0 %88
      %vm90 = vcmask 1014784
      %v91 = vsel %vm90, %v85, %v87
      %v92 = vsel %vm90, %v87, %v89
      %95 = vst [vmem:[#allocation2 + $0x30] sm:$0xff] %v91
      %96 = vst [vmem:[#allocation2 + $0x38] sm:$0xff] %v92
      %v97 = vld [vmem:[%s1] sm:$0xff]
      %v98 = vld [vmem:[%s1 + $0x8] sm:$0xff]
      %v99 = vld [vmem:[%s1 + $0x10] sm:$0xff]
      %103 = vrot.lane.b32.xlu0 %v97, 125
      %v104 = vpop.permute.xlu0 %103
      %105 = vrot.lane.b32.xlu0 %v98, 125
      %v106 = vpop.permute.xlu0 %105
      %107 = vrot.lane.b32.xlu0 %v99, 125
      %v108 = vpop.permute.xlu0 %107
      %vm109 = vcmask 1022976
      %v110 = vsel %vm109, %v104, %v106
      %v111 = vsel %vm109, %v106, %v108
      %114 = vst [vmem:[#allocation2 + $0x40] sm:$0xff] %v110
      %115 = vst [vmem:[#allocation2 + $0x48] sm:$0xff] %v111
      %v116 = vld [vmem:[%s1] sm:$0xff]
      %v117 = vld [vmem:[%s1 + $0x8] sm:$0xff]
      %v118 = vld [vmem:[%s1 + $0x10] sm:$0xff]
      %122 = vrot.lane.b32.xlu0 %v116, 126
      %v123 = vpop.permute.xlu0 %122
      %124 = vrot.lane.b32.xlu0 %v117, 126
      %v125 = vpop.permute.xlu0 %124
      %126 = vrot.lane.b32.xlu0 %v118, 126
      %v127 = vpop.permute.xlu0 %126
      %vm128 = vcmask 1031168
      %v129 = vsel %vm128, %v123, %v125
      %v130 = vsel %vm128, %v125, %v127
      %133 = vst [vmem:[#allocation2 + $0x50] sm:$0xff] %v129
      %134 = vst [vmem:[#allocation2 + $0x58] sm:$0xff] %v130
      %v135 = vld [vmem:[%s1] sm:$0xff]
      %v136 = vld [vmem:[%s1 + $0x8] sm:$0xff]
      %v137 = vld [vmem:[%s1 + $0x10] sm:$0xff]
      %141 = vrot.lane.b32.xlu0 %v135, 127
      %v142 = vpop.permute.xlu0 %141
      %143 = vrot.lane.b32.xlu0 %v136, 127
      %v144 = vpop.permute.xlu0 %143
      %145 = vrot.lane.b32.xlu0 %v137, 127
      %v146 = vpop.permute.xlu0 %145
      %vm147 = vcmask 1039360
      %v148 = vsel %vm147, %v142, %v144
      %v149 = vsel %vm147, %v144, %v146
      %152 = vst [vmem:[#allocation2 + $0x60] sm:$0xff] %v148
      %153 = vst [vmem:[#allocation2 + $0x68] sm:$0xff] %v149
      %v154 = vld [vmem:[%s1] sm:$0xff]
      %v155 = vld [vmem:[%s1 + $0x8] sm:$0xff]
      %156 = vst [vmem:[#allocation2 + $0x70] sm:$0xff] %v154
      %157 = vst [vmem:[#allocation2 + $0x78] sm:$0xff] %v155
      %158 = vst [vmem:[%s4] sm:$0xff] 0.0
      %159 = vst [vmem:[%s4 + $0x8] sm:$0xff] 0.0
    $region17: #{convnmf_forward.1} parent=1 // pred_fallthru
      _
    %v160 = vld [vmem:[%s0] sm:$0xff]
    %v161 = vld [vmem:[%s0 + $0x8] sm:$0xff]
    %v162 = vld [vmem:[%s0 + $0x10] sm:$0xff]
    %v163 = vld [vmem:[%s0 + $0x18] sm:$0xff]
    %v164 = vld [vmem:[#allocation2] sm:$0xff]
    %v165 = vld [vmem:[#allocation2 + $0x8] sm:$0xff]
    %v166 = vld [vmem:[#allocation2 + $0x10] sm:$0xff]
    %v167 = vld [vmem:[#allocation2 + $0x18] sm:$0xff]
    %v168 = vld [vmem:[#allocation2 + $0x20] sm:$0xff]
    %v169 = vld [vmem:[#allocation2 + $0x28] sm:$0xff]
    %v170 = vld [vmem:[#allocation2 + $0x30] sm:$0xff]
    %v171 = vld [vmem:[#allocation2 + $0x38] sm:$0xff]
    %v172 = vld [vmem:[#allocation2 + $0x40] sm:$0xff]
    %v173 = vld [vmem:[#allocation2 + $0x48] sm:$0xff]
    %v174 = vld [vmem:[#allocation2 + $0x50] sm:$0xff]
    %v175 = vld [vmem:[#allocation2 + $0x58] sm:$0xff]
    %v176 = vld [vmem:[#allocation2 + $0x60] sm:$0xff]
    %v177 = vld [vmem:[#allocation2 + $0x68] sm:$0xff]
    %v178 = vld [vmem:[#allocation2 + $0x70] sm:$0xff]
    %v179 = vld [vmem:[#allocation2 + $0x78] sm:$0xff]
    %vm180 = vcmask 523264
    %v182 = vsel %vm180, %v160, 0
    %v185 = vsel %vm180, %v161, 0
    %v188 = vsel %vm180, %v162, 0
    %v191 = vsel %vm180, %v163, 0
    %193 = vmatprep.subr.mxu0 %v165
    %194 = vmatpush1.msra.mxu0 %v164
    %195 = vmatprep.subr.mxu0 %v167
    %196 = vmatpush1.msra.mxu0 %v166
    %197 = vmatprep.subr.mxu0 %v169
    %198 = vmatpush1.msra.mxu0 %v168
    %199 = vmatprep.subr.mxu0 %v171
    %200 = vmatpush1.msra.mxu0 %v170
    %201 = vmatprep.subr.mxu0 %v173
    %202 = vmatpush1.msra.mxu0 %v172
    %203 = vmatprep.subr.mxu0 %v175
    %204 = vmatpush1.msra.mxu0 %v174
    %205 = vmatprep.subr.mxu0 %v177
    %206 = vmatpush1.msra.mxu0 %v176
    %207 = vmatprep.subr.mxu0 %v179
    %208 = vmatpush1.msra.mxu0 %v178
    %209 = vmatprep.subr.mxu0 0.0
    %210 = vmatpush1.msra.mxu0 0.0
    %211 = vmatprep.subr.mxu0 0.0
    %212 = vmatpush1.msra.mxu0 0.0
    %213 = vmatprep.subr.mxu0 0.0
    %214 = vmatpush1.msra.mxu0 0.0
    %215 = vmatprep.subr.mxu0 0.0
    %216 = vmatpush1.msra.mxu0 0.0
    %217 = vmatprep.subr.mxu0 0.0
    %218 = vmatpush1.msra.mxu0 0.0
    %219 = vmatprep.subr.mxu0 0.0
    %220 = vmatpush1.msra.mxu0 0.0
    %221 = vmatprep.subr.mxu0 0.0
    %222 = vmatpush1.msra.mxu0 0.0
    %223 = vmatprep.subr.mxu0 0.0
    %224 = vmatpush1.msra.mxu0 0.0
    %225 = vmatprep.subr.mxu0 0.0
    %226 = vmatpush1.msra.mxu0 0.0
    %227 = vmatprep.subr.mxu0 0.0
    %228 = vmatpush1.msra.mxu0 0.0
    %229 = vmatprep.subr.mxu0 0.0
    %230 = vmatpush1.msra.mxu0 0.0
    %231 = vmatprep.subr.mxu0 0.0
    %232 = vmatpush1.msra.mxu0 0.0
    %233 = vmatprep.subr.mxu0 0.0
    %234 = vmatpush1.msra.mxu0 0.0
    %235 = vmatprep.subr.mxu0 0.0
    %236 = vmatpush1.msra.mxu0 0.0
    %237 = vmatprep.subr.mxu0 0.0
    %238 = vmatpush1.msra.mxu0 0.0
    %239 = vmatprep.subr.mxu0 0.0
    %240 = vmatpush1.msra.mxu0 0.0
    %241 = vmatprep.subr.mxu0 0.0
    %242 = vmatpush1.msra.mxu0 0.0
    %243 = vmatprep.subr.mxu0 0.0
    %244 = vmatpush1.msra.mxu0 0.0
    %245 = vmatprep.subr.mxu0 0.0
    %246 = vmatpush1.msra.mxu0 0.0
    %247 = vmatprep.subr.mxu0 0.0
    %248 = vmatpush1.msra.mxu0 0.0
    %249 = vmatprep.subr.mxu0 0.0
    %250 = vmatpush1.msra.mxu0 0.0
    %251 = vmatprep.subr.mxu0 0.0
    %252 = vmatpush1.msra.mxu0 0.0
    %253 = vmatprep.subr.mxu0 0.0
    %254 = vmatpush1.msra.mxu0 0.0
    %255 = vmatprep.subr.mxu0 0.0
    %256 = vmatpush1.msra.mxu0 0.0
    %257 = vmatprep.mubr.f32.mxu0 0.0
    %258 = vmatmul.mubr.f32.gmra.mrb[0].mxu0 %v182
    %v259 = vpop.f32.mrb[0].mxu0
    %v260 = vadd.f32 0.0, %v259
    %v261 = vpop.f32.mrb[0].mxu0
    %v262 = vadd.f32 0.0, %v261
    %263 = vmatprep.mubr.f32.mxu0 0.0
    %264 = vmatmul.mubr.f32.gmra.mrb[0].mxu0 %v185
    %v265 = vpop.f32.mrb[0].mxu0
    %v266 = vadd.f32 0.0, %v265
    %v267 = vpop.f32.mrb[0].mxu0
    %v268 = vadd.f32 0.0, %v267
    %269 = vmatprep.mubr.f32.mxu0 0.0
    %270 = vmatmul.mubr.f32.gmra.mrb[0].mxu0 %v188
    %v271 = vpop.f32.mrb[0].mxu0
    %v272 = vadd.f32 0.0, %v271
    %v273 = vpop.f32.mrb[0].mxu0
    %v274 = vadd.f32 0.0, %v273
    %275 = vmatprep.mubr.f32.mxu0 0.0
    %276 = vmatmul.mubr.f32.gmra.mrb[0].mxu0 %v191
    %v277 = vpop.f32.mrb[0].mxu0
    %v278 = vadd.f32 0.0, %v277
    %v279 = vpop.f32.mrb[0].mxu0
    %v280 = vadd.f32 0.0, %v279
    %281 = vdwg.mxu0
    %282 = vst [vmem:[#allocation3] sm:$0xff] %v260
    %283 = vst [vmem:[#allocation3 + $0x8] sm:$0xff] %v262
    %284 = vst [vmem:[#allocation3 + $0x10] sm:$0xff] %v266
    %285 = vst [vmem:[#allocation3 + $0x18] sm:$0xff] %v268
    %286 = vst [vmem:[#allocation3 + $0x20] sm:$0xff] %v272
    %287 = vst [vmem:[#allocation3 + $0x28] sm:$0xff] %v274
    %288 = vst [vmem:[#allocation3 + $0x30] sm:$0xff] %v278
    %289 = vst [vmem:[#allocation3 + $0x38] sm:$0xff] %v280
    %v290 = vld [vmem:[%s2] sm:$0xff]
    %v291 = vld [vmem:[%s2 + $0x8] sm:$0xff]
    %v292 = vld [vmem:[%s2 + $0x10] sm:$0xff]
    %v293 = vld [vmem:[%s2 + $0x18] sm:$0xff]
    %v294 = vld [vmem:[%s2 + $0x20] sm:$0xff]
    %v295 = vld [vmem:[%s2 + $0x28] sm:$0xff]
    %v296 = vld [vmem:[%s2 + $0x30] sm:$0xff]
    %v297 = vld [vmem:[%s2 + $0x38] sm:$0xff]
    %v298 = vsub.f32 %v260, %v290
    %v299 = vsub.f32 %v262, %v291
    %v300 = vsub.f32 %v266, %v292
    %v301 = vsub.f32 %v268, %v293
    %v302 = vsub.f32 %v272, %v294
    %v303 = vsub.f32 %v274, %v295
    %v304 = vsub.f32 %v278, %v296
    %v305 = vsub.f32 %v280, %v297
    %v306 = vmul.f32 %v298, %v298
    %v307 = vmul.f32 %v299, %v299
    %v308 = vmul.f32 %v300, %v300
    %v309 = vmul.f32 %v301, %v301
    %v310 = vmul.f32 %v302, %v302
    %v311 = vmul.f32 %v303, %v303
    %v312 = vmul.f32 %v304, %v304
    %v313 = vmul.f32 %v305, %v305
    %v314 = vadd.f32 %v306, %v308
    %v315 = vadd.f32 %v314, %v310
    %v316 = vadd.f32 %v315, %v312
    %v317 = vadd.f32 %v307, %v309
    %v318 = vadd.f32 %v317, %v311
    %v319 = vadd.f32 %v318, %v313
    %v320 = vld [vmem:[%s4] sm:$0xff]
    %v321 = vld [vmem:[%s4 + $0x8] sm:$0xff]
    %v322 = vadd.f32 %v320, %v316
    %v323 = vadd.f32 %v321, %v319
    %324 = vst [vmem:[%s4] sm:$0xff] %v322
    %325 = vst [vmem:[%s4 + $0x8] sm:$0xff] %v323
    // Predicated region
    $region18: #{convnmf_forward.1} parent=1 // pred_check
      _
    $region19: #{convnmf_forward.1} parent=1 // pred_check_branch
      %327 = sbr.rel (0) target = $region21
    $region20: #{convnmf_forward.1} parent=1 // pred_region
      %s329 = ssub.s32 1024, 1024
      %330 = vsyncadd [#allocation4], %s329
      %s331 = sshll.u32 [#allocation3], 4
      %s332 = int_to_ptr.vmem [resolvable:$true] %s331
      %337 = dma.vmem_to_hbm [thread:$0]  %s332, 1024, %s3, [#allocation4], 256, 256, 16
    $region21: #{convnmf_forward.1} parent=1 // pred_fallthru
      _
    // Predicated region
    $region22: #{convnmf_forward.1} parent=1 // pred_check
      _
    $region23: #{convnmf_forward.1} parent=1 // pred_check_branch
      %339 = sbr.rel (0) target = $region25
    $region24: #{convnmf_forward.1} parent=1 // pred_region
      _
    $region25: #{convnmf_forward.1} parent=1 // pred_fallthru
      _
    // Predicated region
    $region26: #{convnmf_forward.1} parent=1 // pred_check
      _
    $region27: #{convnmf_forward.1} parent=1 // pred_check_branch
      %341 = sbr.rel (0) target = $region29
    $region28: #{convnmf_forward.1} parent=1 // pred_region
      %342 = dma.done [#allocation4], 1024
    $region29: #{convnmf_forward.1} parent=1 // pred_fallthru
      _
    // Predicated region
    $region30: #{convnmf_forward.1} parent=1 // pred_check
      _
    $region31: #{convnmf_forward.1} parent=1 // pred_check_branch
      %344 = sbr.rel (0) target = $region33
    $region32: #{convnmf_forward.1} parent=1 // pred_region
      _
    $region33: #{convnmf_forward.1} parent=1 // pred_fallthru
      _
    %345 = vsyncpa [#allocation4], 1

</llo_original>
